<compile_context>
chip_gen: v5e
topology: v5e:2x2
jax: 0.10.0
libtpu: 0.0.40
codegen_flags: <defaults>
</compile_context>

<pallas_src>
import functools
import math

import jax
import jax.numpy as jnp
from jax.experimental import pallas as pl
from jax.experimental.pallas import tpu as pltpu


def _posemb_kernel(x_ref, w_ref, o_ref):
    # x_ref: (TB, 1) timestep column for this batch tile.
    # w_ref: (1, half_dim) fp32 learnable frequencies (resident across grid).
    # o_ref: (TB, 1 + 2*half_dim) output tile.
    x = x_ref[...].astype(jnp.float32)            # (TB, 1)
    w = w_ref[...].astype(jnp.float32)            # (1, half_dim)
    half = w.shape[1]

    freqs = x * w * (2.0 * math.pi)               # (TB, half_dim), broadcast

    o_ref[:, 0:1] = x.astype(o_ref.dtype)                          # x column
    o_ref[:, 1:1 + half] = jnp.sin(freqs).astype(o_ref.dtype)      # sin block
    o_ref[:, 1 + half:1 + 2 * half] = jnp.cos(freqs).astype(o_ref.dtype)  # cos block


def random_or_learned_sinusoidal_pos_emb(x, weights):
    """x: (B,) timesteps; weights: (half_dim,) learnable/random frequencies.

    Returns (B, 2*half_dim + 1) = concat([x, sin(freqs), cos(freqs)], -1).
    """
    B = x.shape[0]
    half_dim = weights.shape[0]
    dim = 2 * half_dim
    out_dtype = jnp.promote_types(x.dtype, jnp.float32)

    # Batch tiling: one block if B is small; otherwise 1024-row tiles (multiple
    # of 8 sublanes) with padding so the grid divides evenly.
    TB = B if B <= 1024 else 1024
    n_tiles = pl.cdiv(B, TB)
    Bp = TB * n_tiles

    x2 = x.reshape(B, 1)
    if Bp != B:
        x2 = jnp.pad(x2, ((0, Bp - B), (0, 0)))
    w2 = weights.reshape(1, half_dim).astype(jnp.float32)  # keep parameter in fp32

    out = pl.pallas_call(
        _posemb_kernel,
        out_shape=jax.ShapeDtypeStruct((Bp, dim + 1), out_dtype),
        grid=(n_tiles,),
        in_specs=[
            pl.BlockSpec((TB, 1), lambda b: (b, 0)),          # per-tile timesteps
            pl.BlockSpec((1, half_dim), lambda b: (0, 0)),    # weights: resident
        ],
        out_specs=pl.BlockSpec((TB, dim + 1), lambda b: (b, 0)),
        compiler_params=pltpu.CompilerParams(
            dimension_semantics=("parallel",),
        ),
    )(x2, w2)

    if Bp != B:
        out = out[:B]
    return out


def _reference(x, weights):
    x2 = x.reshape(-1, 1).astype(jnp.float32)
    w = weights.reshape(1, -1).astype(jnp.float32)
    freqs = x2 * w * (2.0 * math.pi)
    return jnp.concatenate([x2, jnp.sin(freqs), jnp.cos(freqs)], axis=-1)


if __name__ == "__main__":
    B, dim = 8, 32
    half_dim = dim // 2

    key = jax.random.PRNGKey(0)
    kx, kw = jax.random.split(key)
    # Diffusion-style timesteps (modest magnitude keeps sin/cos well-conditioned
    # for the tolerance check).
    x = jax.random.uniform(kx, (B,), dtype=jnp.float32) * 10.0
    # nn.Parameter(torch.randn(half_dim)) equivalent.
    weights = jax.random.normal(kw, (half_dim,), dtype=jnp.float32)

    out = random_or_learned_sinusoidal_pos_emb(x, weights)
    out = jax.block_until_ready(out)

    ref = _reference(x, weights)
    assert out.shape == (B, dim + 1), out.shape
    assert jnp.allclose(out, ref, atol=1e-5, rtol=1e-5)
    print("KERNEL_OK")
</pallas_src>

<mosaic_0001>
module attributes {stable_mosaic.version = 11 : i64} {
  func.func @_posemb_kernel(%arg0: i32, %arg1: memref<8x1xf32, #tpu.memory_space<vmem>>, %arg2: memref<1x16xf32, #tpu.memory_space<vmem>>, %arg3: memref<8x33xf32, #tpu.memory_space<vmem>>) attributes {dimension_semantics = [#tpu.dimension_semantics<parallel>], iteration_bounds = array<i64: 1>, scalar_prefetch = 0 : i64, scratch_operands = 0 : i64, tpu.core_type = #tpu.core_type<tc>, window_params = [{transform_indices = @transform_0, window_bounds = array<i64: 8, 1>}, {pipeline_mode = #tpu.pipeline_mode<synchronous>, transform_indices = @transform_1, window_bounds = array<i64: 1, 16>}, {transform_indices = @transform_2, window_bounds = array<i64: 8, 33>}]} {
    %c0 = arith.constant 0 : index
    %c0_0 = arith.constant 0 : index
    %0 = vector.load %arg1[%c0, %c0_0] : memref<8x1xf32, #tpu.memory_space<vmem>>, vector<8x1xf32>
    %c0_1 = arith.constant 0 : index
    %c0_2 = arith.constant 0 : index
    %1 = vector.load %arg2[%c0_1, %c0_2] : memref<1x16xf32, #tpu.memory_space<vmem>>, vector<1x16xf32>
    %2 = vector.broadcast %0 : vector<8x1xf32> to vector<8x16xf32>
    %3 = vector.broadcast %1 : vector<1x16xf32> to vector<8x16xf32>
    %4 = arith.mulf %2, %3 : vector<8x16xf32>
    %cst = arith.constant 6.28318548 : f32
    %5 = vector.broadcast %cst : f32 to vector<8x16xf32>
    %6 = arith.mulf %4, %5 : vector<8x16xf32>
    %c0_3 = arith.constant 0 : index
    %c0_4 = arith.constant 0 : index
    %7 = vector.load %arg3[%c0_3, %c0_4] : memref<8x33xf32, #tpu.memory_space<vmem>>, vector<8x1xf32>
    tpu.vector_store %arg3[%c0_3, %c0_4], %0 {strides = array<i32>} : memref<8x33xf32, #tpu.memory_space<vmem>>, vector<8x1xf32>,
    %8 = math.sin %6 : vector<8x16xf32>
    %c0_5 = arith.constant 0 : index
    %c1 = arith.constant 1 : index
    %9 = vector.load %arg3[%c0_5, %c1] : memref<8x33xf32, #tpu.memory_space<vmem>>, vector<8x16xf32>
    tpu.vector_store %arg3[%c0_5, %c1], %8 {strides = array<i32>} : memref<8x33xf32, #tpu.memory_space<vmem>>, vector<8x16xf32>,
    %10 = math.cos %6 : vector<8x16xf32>
    %c0_6 = arith.constant 0 : index
    %c17 = arith.constant 17 : index
    %11 = vector.load %arg3[%c0_6, %c17] : memref<8x33xf32, #tpu.memory_space<vmem>>, vector<8x16xf32>
    tpu.vector_store %arg3[%c0_6, %c17], %10 {strides = array<i32>} : memref<8x33xf32, #tpu.memory_space<vmem>>, vector<8x16xf32>,
    return
  }
  func.func @transform_0(%arg0: i32) -> (i32, i32) {
    %c0_i32 = arith.constant 0 : i32
    %c0_i32_0 = arith.constant 0 : i32
    return %arg0, %c0_i32 : i32, i32
  }
  func.func @transform_1(%arg0: i32) -> (i32, i32) {
    %c0_i32 = arith.constant 0 : i32
    %c0_i32_0 = arith.constant 0 : i32
    %c0_i32_1 = arith.constant 0 : i32
    return %c0_i32, %c0_i32_0 : i32, i32
  }
  func.func @transform_2(%arg0: i32) -> (i32, i32) {
    %c0_i32 = arith.constant 0 : i32
    %c0_i32_0 = arith.constant 0 : i32
    return %arg0, %c0_i32 : i32, i32
  }
}

</mosaic_0001>

<llo_original>
// kernel: tpu_custom_call.1
$region0: #{tpu_custom_call.1}
  #allocation0 [shape = 'u32[]', space=smem, size = 0x4, offset = 0x4, fixed_abs, tag = 'smem constant byte address 0x4 - core index']
  #allocation1 [shape = 'u32[72,128]{1,0:T(1,128)}', space=vmem, size = 0x9000, scoped, tag = 'internal scratch']
  %s0 = inlined_call_operand.vmem [shape: f32[8,1], index: 0, kind: input, shape index: {}]
  %s1 = inlined_call_operand.vmem [shape: f32[1,16], index: 1, kind: input, shape index: {}]
  %s2 = inlined_call_operand.hbm [shape: f32[8,33], index: 2, kind: output, shape index: {}]
  %s3 = sld [smem:[#allocation0]]
  $region18: #{tpu_custom_call.1} parent=0
    _
  %s5 = ssub.s32 1, %s3
  %s6 = scalar_select 0, %s5, %s3
  $region1: #{tpu_custom_call.1} parent=0
    #allocation2 [shape = 'u8[4096]{0}', space=vmem, size = 0x1000, scoped, tag = 'output window, operand 0, single buffered']
    #allocation3 [shape = 's32[1]{0}', space=sflag, size = 0x4, scoped, tag = 'scoped memory for tpu_custom_call.1']
    %7 = vsyncpa [#allocation3], 0
    // Predicated region
    $region2: #{tpu_custom_call.1} parent=1 // pred_check
      _
    $region3: #{tpu_custom_call.1} parent=1 // pred_check_branch
      %9 = sbr.rel (0) target = $region5
    $region4: #{tpu_custom_call.1} parent=1 // pred_region
      _
    $region5: #{tpu_custom_call.1} parent=1 // pred_fallthru
      _
    // Predicated region
    $region6: #{tpu_custom_call.1} parent=1 // pred_check
      _
    $region7: #{tpu_custom_call.1} parent=1 // pred_check_branch
      %11 = sbr.rel (0) target = $region9
    $region8: #{tpu_custom_call.1} parent=1 // pred_region
      _
    $region9: #{tpu_custom_call.1} parent=1 // pred_fallthru
      _
    %v12 = vld [vmem:[%s0] sm:$0xff]
    %v13 = vld [vmem:[%s1] sm:$0x1]
    %15 = vset.pattern.permute.xlu0 0
    %16 = vperm.xlu0 %15, %v12
    %v17 = vpop.permute.xlu0 %16
    %v20 = vperm.slane %v13, 0
    %v22 = vmul.f32 %v17, %v20
    %v23 = vmul.f32 %v22, 6.2831855
    %vm24 = vcmask 7168
    %25 = vst.msk [vmem:[#allocation2] sm:$0xff] %vm24, %v12
    %v26 = vand.u32 2147483647, %v23
    %vm27 = vcmp.le.f32.partialorder %v26, 0.7853982
    %vm28 = vcmp.lt.s32.totalorder %v23, 0
    %v29 = vand.u32 %v23, 2139095040
    %v30 = vshrl.u32 %v29, 23
    %v31 = vsub.s32 %v30, 127
    %v32 = vand.u32 2147483647, %v23
    %v33 = vand.u32 %v32, 8388607
    %v34 = vor.u32 %v33, 8388608
    %v35 = vsub.s32 0, %v34
    %v36 = vadd.s32 %v31, 1
    %vm37 = vcmp.gt.s32.totalorder %v36, 0
    %v38 = vsel %vm37, %v36, 0
    %v39 = vshrl.u32 %v38, 5
    %v40 = vand.u32 %v38, 31
    %v41 = vsub.s32 32, %v40
    %v42 = vshrl.u32 683565275, %v41
    %v43 = vshll.u32 683565275, %v40
    %v44 = vshrl.u32 2475754826, %v41
    %v45 = vor.u32 %v43, %v44
    %v46 = vshll.u32 2475754826, %v40
    %v47 = vshrl.u32 2131351028, %v41
    %v48 = vor.u32 %v46, %v47
    %v49 = vshll.u32 2131351028, %v40
    %v50 = vshrl.u32 2102212464, %v41
    %v51 = vor.u32 %v49, %v50
    %v52 = vshll.u32 2102212464, %v40
    %v53 = vshrl.u32 920167782, %v41
    %v54 = vor.u32 %v52, %v53
    %v55 = vshll.u32 920167782, %v40
    %v56 = vshrl.u32 1326507024, %v41
    %v57 = vor.u32 %v55, %v56
    %vm58 = vcmp.lt.s32.totalorder %v39, 1
    %vm59 = vcmp.lt.s32.totalorder %v39, 2
    %vm60 = vcmp.lt.s32.totalorder %v39, 3
    %vm61 = vcmp.lt.s32.totalorder %v39, 4
    %v62 = vsel %vm58, %v42, %v45
    %v63 = vsel %vm61, %v51, 2102212464
    %v64 = vsel %vm60, %v48, %v63
    %v65 = vsel %vm59, %v62, %v64
    %v66 = vsel %vm58, %v45, %v48
    %v67 = vsel %vm61, %v54, 920167782
    %v68 = vsel %vm60, %v51, %v67
    %v69 = vsel %vm59, %v66, %v68
    %v70 = vsel %vm58, %v48, %v51
    %v71 = vsel %vm61, %v57, 1326507024
    %v72 = vsel %vm60, %v54, %v71
    %v73 = vsel %vm59, %v70, %v72
    %v74 = vshll.u32 %v34, 8
    %v75 = vand.u32 %v74, 65535
    %v76 = vshrl.u32 %v74, 16
    %v77 = vand.u32 %v73, 65535
    %v78 = vshrl.u32 %v73, 16
    %v79 = vmul.u32 %v75, %v77
    %v80 = vmul.u32 %v75, %v78
    %v81 = vmul.u32 %v76, %v77
    %v82 = vmul.u32 %v76, %v78
    %v83 = vshll.u32 %v80, 16
    %v84 = vshrl.u32 %v80, 16
    %v85 = vshll.u32 %v81, 16
    %v86 = vshrl.u32 %v81, 16
    %vm87 = vc.u32 %v79, %v83
    %v88 = vsel %vm87, 1, 0
    %v89 = vadd.s32 %v79, %v83
    %v90 = vadd.s32 %v82, %v88
    %vm91 = vc.u32 %v89, %v85
    %v92 = vsel %vm91, 1, 0
    %v93 = vadd.s32 %v89, %v85
    %v94 = vadd.s32 %v90, %v92
    %v95 = vadd.s32 %v94, %v84
    %v96 = vadd.s32 %v95, %v86
    %v97 = vand.u32 %v74, 65535
    %v98 = vshrl.u32 %v74, 16
    %v99 = vand.u32 %v69, 65535
    %v100 = vshrl.u32 %v69, 16
    %v101 = vmul.u32 %v97, %v99
    %v102 = vmul.u32 %v97, %v100
    %v103 = vmul.u32 %v98, %v99
    %v104 = vmul.u32 %v98, %v100
    %v105 = vshll.u32 %v102, 16
    %v106 = vshrl.u32 %v102, 16
    %v107 = vshll.u32 %v103, 16
    %v108 = vshrl.u32 %v103, 16
    %vm109 = vc.u32 %v101, %v105
    %v110 = vsel %vm109, 1, 0
    %v111 = vadd.s32 %v101, %v105
    %v112 = vadd.s32 %v104, %v110
    %vm113 = vc.u32 %v111, %v107
    %v114 = vsel %vm113, 1, 0
    %v115 = vadd.s32 %v111, %v107
    %v116 = vadd.s32 %v112, %v114
    %v117 = vadd.s32 %v116, %v106
    %v118 = vadd.s32 %v117, %v108
    %v119 = vmul.u32 %v74, %v65
    %v120 = vadd.s32 %v96, %v115
    %vm121 = vc.u32 %v96, %v115
    %v122 = vadd.s32 %v118, 1
    %v123 = vsel %vm121, %v122, %v118
    %v124 = vadd.s32 %v119, %v123
    %v125 = vadd.s32 %v124, 536870912
    %v126 = vshrl.u32 %v125, 30
    %v127 = vshll.u32 %v126, 30
    %v128 = vsub.s32 %v124, %v127
    %vm129 = vcmp.lt.s32.totalorder %v128, 0
    %v130 = vsub.s32 0, %v128
    %v131 = vsel %vm129, %v130, %v128
    %v132 = vclz %v131
    %v133 = vsub.s32 %v132, 2
    %vm134 = vcmp.gt.s32.totalorder 0, %v133
    %v135 = vsel %vm134, 0, %v133
    %v136 = vsub.s32 32, %v135
    %v137 = vshll.u32 %v128, %v135
    %v138 = vshrl.u32 %v120, %v136
    %v139 = vor.u32 %v137, %v138
    %v140 = vsub.s32 4294967266, %v135
    %v141 = vadd.s32 %v140, 127
    %v142 = vshll.u32 %v141, 23
    %v143 = vor.u32 4788187, %v142
    %v144 = vand.u32 2147483647, %v143
    %v146 = vcvt.s32.f32 %v139
    %v147 = vmul.f32 %v146, %v144
    %v148 = vxor.u32 %v147, 2147483648
    %v149 = vsel %vm28, %v148, %v147
    %v150 = vsub.s32 4, %v126
    %v151 = vsel %vm28, %v150, %v126
    %v152 = vsel %vm27, %v23, %v149
    %v153 = vsel %vm27, 0, %v151
    %v154 = vmul.f32 %v152, %v152
    %v155 = vmul.f32 %v154, -0.001358992
    %v156 = vadd.f32 %v155, 0.041655596
    %v157 = vmul.f32 %v154, %v156
    %v158 = vadd.f32 %v157, -0.4999988
    %v159 = vmul.f32 %v154, %v158
    %v160 = vadd.f32 1.0, %v159
    %v161 = vmul.f32 %v152, %v152
    %v162 = vmul.f32 %v161, -0.00019511016
    %v163 = vadd.f32 %v162, 0.008332121
    %v164 = vmul.f32 %v161, %v163
    %v165 = vadd.f32 %v164, -0.16666654
    %v166 = vmul.f32 %v161, %v165
    %v167 = vadd.f32 %v166, 1.0
    %v168 = vmul.f32 %v167, %v152
    %vm169 = vweird.f32 %v23
    %v170 = vadd.s32 %v153, 3
    %v171 = vand.u32 %v170, 3
    %vm172 = vcmp.lt.s32.totalorder %v171, 2
    %vm173 = vcmp.eq.s32.totalorder %v171, 0
    %v174 = vxor.u32 %v168, 2147483648
    %v175 = vsel %vm173, %v160, %v174
    %vm176 = vcmp.eq.s32.totalorder %v171, 2
    %v177 = vxor.u32 %v160, 2147483648
    %v178 = vsel %vm176, %v177, %v168
    %v179 = vsel %vm172, %v175, %v178
    %v180 = vsel %vm169, nan, %v179
    %182 = vrot.lane.b32.xlu0 %v180, 1
    %v183 = vpop.permute.xlu0 %182
    %vm185 = vcmask 138248
    %186 = vst.msk [vmem:[#allocation2] sm:$0xff] %vm185, %v183
    %v187 = vand.u32 2147483647, %v23
    %vm188 = vcmp.le.f32.partialorder %v187, 0.7853982
    %vm189 = vcmp.lt.s32.totalorder %v23, 0
    %v190 = vand.u32 %v23, 2139095040
    %v191 = vshrl.u32 %v190, 23
    %v192 = vsub.s32 %v191, 127
    %v193 = vand.u32 2147483647, %v23
    %v194 = vand.u32 %v193, 8388607
    %v195 = vor.u32 %v194, 8388608
    %v196 = vsub.s32 0, %v195
    %v197 = vadd.s32 %v192, 1
    %vm198 = vcmp.gt.s32.totalorder %v197, 0
    %v199 = vsel %vm198, %v197, 0
    %v200 = vshrl.u32 %v199, 5
    %v201 = vand.u32 %v199, 31
    %v202 = vsub.s32 32, %v201
    %v203 = vshrl.u32 683565275, %v202
    %v204 = vshll.u32 683565275, %v201
    %v205 = vshrl.u32 2475754826, %v202
    %v206 = vor.u32 %v204, %v205
    %v207 = vshll.u32 2475754826, %v201
    %v208 = vshrl.u32 2131351028, %v202
    %v209 = vor.u32 %v207, %v208
    %v210 = vshll.u32 2131351028, %v201
    %v211 = vshrl.u32 2102212464, %v202
    %v212 = vor.u32 %v210, %v211
    %v213 = vshll.u32 2102212464, %v201
    %v214 = vshrl.u32 920167782, %v202
    %v215 = vor.u32 %v213, %v214
    %v216 = vshll.u32 920167782, %v201
    %v217 = vshrl.u32 1326507024, %v202
    %v218 = vor.u32 %v216, %v217
    %vm219 = vcmp.lt.s32.totalorder %v200, 1
    %vm220 = vcmp.lt.s32.totalorder %v200, 2
    %vm221 = vcmp.lt.s32.totalorder %v200, 3
    %vm222 = vcmp.lt.s32.totalorder %v200, 4
    %v223 = vsel %vm219, %v203, %v206
    %v224 = vsel %vm222, %v212, 2102212464
    %v225 = vsel %vm221, %v209, %v224
    %v226 = vsel %vm220, %v223, %v225
    %v227 = vsel %vm219, %v206, %v209
    %v228 = vsel %vm222, %v215, 920167782
    %v229 = vsel %vm221, %v212, %v228
    %v230 = vsel %vm220, %v227, %v229
    %v231 = vsel %vm219, %v209, %v212
    %v232 = vsel %vm222, %v218, 1326507024
    %v233 = vsel %vm221, %v215, %v232
    %v234 = vsel %vm220, %v231, %v233
    %v235 = vshll.u32 %v195, 8
    %v236 = vand.u32 %v235, 65535
    %v237 = vshrl.u32 %v235, 16
    %v238 = vand.u32 %v234, 65535
    %v239 = vshrl.u32 %v234, 16
    %v240 = vmul.u32 %v236, %v238
    %v241 = vmul.u32 %v236, %v239
    %v242 = vmul.u32 %v237, %v238
    %v243 = vmul.u32 %v237, %v239
    %v244 = vshll.u32 %v241, 16
    %v245 = vshrl.u32 %v241, 16
    %v246 = vshll.u32 %v242, 16
    %v247 = vshrl.u32 %v242, 16
    %vm248 = vc.u32 %v240, %v244
    %v249 = vsel %vm248, 1, 0
    %v250 = vadd.s32 %v240, %v244
    %v251 = vadd.s32 %v243, %v249
    %vm252 = vc.u32 %v250, %v246
    %v253 = vsel %vm252, 1, 0
    %v254 = vadd.s32 %v250, %v246
    %v255 = vadd.s32 %v251, %v253
    %v256 = vadd.s32 %v255, %v245
    %v257 = vadd.s32 %v256, %v247
    %v258 = vand.u32 %v235, 65535
    %v259 = vshrl.u32 %v235, 16
    %v260 = vand.u32 %v230, 65535
    %v261 = vshrl.u32 %v230, 16
    %v262 = vmul.u32 %v258, %v260
    %v263 = vmul.u32 %v258, %v261
    %v264 = vmul.u32 %v259, %v260
    %v265 = vmul.u32 %v259, %v261
    %v266 = vshll.u32 %v263, 16
    %v267 = vshrl.u32 %v263, 16
    %v268 = vshll.u32 %v264, 16
    %v269 = vshrl.u32 %v264, 16
    %vm270 = vc.u32 %v262, %v266
    %v271 = vsel %vm270, 1, 0
    %v272 = vadd.s32 %v262, %v266
    %v273 = vadd.s32 %v265, %v271
    %vm274 = vc.u32 %v272, %v268
    %v275 = vsel %vm274, 1, 0
    %v276 = vadd.s32 %v272, %v268
    %v277 = vadd.s32 %v273, %v275
    %v278 = vadd.s32 %v277, %v267
    %v279 = vadd.s32 %v278, %v269
    %v280 = vmul.u32 %v235, %v226
    %v281 = vadd.s32 %v257, %v276
    %vm282 = vc.u32 %v257, %v276
    %v283 = vadd.s32 %v279, 1
    %v284 = vsel %vm282, %v283, %v279
    %v285 = vadd.s32 %v280, %v284
    %v286 = vadd.s32 %v285, 536870912
    %v287 = vshrl.u32 %v286, 30
    %v288 = vshll.u32 %v287, 30
    %v289 = vsub.s32 %v285, %v288
    %vm290 = vcmp.lt.s32.totalorder %v289, 0
    %v291 = vsub.s32 0, %v289
    %v292 = vsel %vm290, %v291, %v289
    %v293 = vclz %v292
    %v294 = vsub.s32 %v293, 2
    %vm295 = vcmp.gt.s32.totalorder 0, %v294
    %v296 = vsel %vm295, 0, %v294
    %v297 = vsub.s32 32, %v296
    %v298 = vshll.u32 %v289, %v296
    %v299 = vshrl.u32 %v281, %v297
    %v300 = vor.u32 %v298, %v299
    %v301 = vsub.s32 4294967266, %v296
    %v302 = vadd.s32 %v301, 127
    %v303 = vshll.u32 %v302, 23
    %v304 = vor.u32 4788187, %v303
    %v305 = vand.u32 2147483647, %v304
    %v307 = vcvt.s32.f32 %v300
    %v308 = vmul.f32 %v307, %v305
    %v309 = vxor.u32 %v308, 2147483648
    %v310 = vsel %vm189, %v309, %v308
    %v311 = vsub.s32 4, %v287
    %v312 = vsel %vm189, %v311, %v287
    %v313 = vsel %vm188, %v23, %v310
    %v314 = vsel %vm188, 0, %v312
    %v315 = vmul.f32 %v313, %v313
    %v316 = vmul.f32 %v315, -0.001358992
    %v317 = vadd.f32 %v316, 0.041655596
    %v318 = vmul.f32 %v315, %v317
    %v319 = vadd.f32 %v318, -0.4999988
    %v320 = vmul.f32 %v315, %v319
    %v321 = vadd.f32 1.0, %v320
    %v322 = vmul.f32 %v313, %v313
    %v323 = vmul.f32 %v322, -0.00019511016
    %v324 = vadd.f32 %v323, 0.008332121
    %v325 = vmul.f32 %v322, %v324
    %v326 = vadd.f32 %v325, -0.16666654
    %v327 = vmul.f32 %v322, %v326
    %v328 = vadd.f32 %v327, 1.0
    %v329 = vmul.f32 %v328, %v313
    %vm330 = vweird.f32 %v23
    %v331 = vand.u32 %v314, 3
    %vm332 = vcmp.lt.s32.totalorder %v331, 2
    %vm333 = vcmp.eq.s32.totalorder %v331, 0
    %v334 = vxor.u32 %v329, 2147483648
    %v335 = vsel %vm333, %v321, %v334
    %vm336 = vcmp.eq.s32.totalorder %v331, 2
    %v337 = vxor.u32 %v321, 2147483648
    %v338 = vsel %vm336, %v337, %v329
    %v339 = vsel %vm332, %v335, %v338
    %v340 = vsel %vm330, nan, %v339
    %342 = vrot.lane.b32.xlu0 %v340, 17
    %v343 = vpop.permute.xlu0 %342
    %vm345 = vcmask 269448
    %346 = vst.msk [vmem:[#allocation2] sm:$0xff] %vm345, %v343
    // Predicated region
    $region10: #{tpu_custom_call.1} parent=1 // pred_check
      _
    $region11: #{tpu_custom_call.1} parent=1 // pred_check_branch
      %348 = sbr.rel (0) target = $region13
    $region12: #{tpu_custom_call.1} parent=1 // pred_region
      %350 = vsyncadd [#allocation3], 0
      %s352 = sshll.u32 [#allocation2], 4
      %s353 = int_to_ptr.vmem [resolvable:$true] %s352
      %s354 = sshll.u32 %s2, 4
      %s355 = int_to_ptr.hbm [resolvable:$true] %s354
      %357 = dma.vmem_to_hbm [thread:$0]  %s353, 128, %s355, [#allocation3]
    $region13: #{tpu_custom_call.1} parent=1 // pred_fallthru
      _
    // Predicated region
    $region14: #{tpu_custom_call.1} parent=1 // pred_check
      _
    $region15: #{tpu_custom_call.1} parent=1 // pred_check_branch
      %359 = sbr.rel (0) target = $region17
    $region16: #{tpu_custom_call.1} parent=1 // pred_region
      %361 = dma.done [#allocation3], 128
    $region17: #{tpu_custom_call.1} parent=1 // pred_fallthru
      _
    %362 = vsyncpa [#allocation3], 1

</llo_original>
